<compile_context>
chip_gen: v7x
topology: tpu7x:2x2x1
jax: 0.10.0
libtpu: 0.0.40
codegen_flags: <defaults>
</compile_context>

<pallas_src>
from functools import partial

import jax
import jax.numpy as jnp
from jax import lax
from jax.experimental import pallas as pl
from jax.experimental.pallas import tpu as pltpu

_EPS = 1e-12                            # F.normalize default eps (clamps the L2 norm)
_NEG_INF = -1e30                        # mask value for out-of-range key columns
_TARGET_TILE_BYTES = 8 * 1024 * 1024    # per-buffer budget for one key tile
_VMEM_LIMIT_BYTES = 48 * 1024 * 1024    # safe on v5e/v6e (128 MiB) and v7x (64 MiB)
_NUM_SHARDS = 2                         # outer "parallel" axis (v7x has 2 TensorCores)


def _normalize_rows(x):
    """x / max(||x||_2, eps) along the last dim == F.normalize(x, dim=-1)."""
    sumsq = jnp.sum(x * x, axis=-1, keepdims=True)
    return x * lax.rsqrt(jnp.maximum(sumsq, _EPS * _EPS))


# ---------------------------------------------------------------------------
# streaming kernel: online log-sum-exp over key tiles (per N-shard partials)
# ---------------------------------------------------------------------------
def _infonce_stream_kernel(qn_ref, pos_ref, keys_ref, m_out_ref, l_out_ref,
                           m_sc, l_sc, *, num_valid, tile_n, steps_per_core,
                           need_mask):
    i = pl.program_id(0)        # N-shard index ("parallel" -> one per TensorCore)
    k = pl.program_id(1)        # key-tile index inside the shard ("arbitrary")

    # per-shard init: seed the running max with the positive logit (a valid,
    # finite logit) so fully-masked tiles can never poison the accumulator.
    @pl.when(k == 0)
    def _init():
        m_sc[...] = pos_ref[...]
        l_sc[...] = jnp.zeros_like(l_sc)

    keys = keys_ref[...]                                       # (tile_n, D) native dtype
    keys_f32 = keys.astype(jnp.float32)

    # per-key inverse L2 norm, produced lane-dense as (1, tile_n) via a tiny
    # ones-row MXU matmul over the squared tile (avoids a sublane->lane
    # transpose and never materializes a normalized copy of the tile).
    ones_row = jnp.ones((1, keys.shape[1]), jnp.float32)
    sumsq = lax.dot_general(ones_row, keys_f32 * keys_f32,
                            (((1,), (1,)), ((), ())),
                            preferred_element_type=jnp.float32)  # (1, tile_n)
    inv_norm = lax.rsqrt(jnp.maximum(sumsq, _EPS * _EPS))

    # flash-attention-style q . k^T on the raw tile; q is pre-normalized with
    # 1/temperature folded in, so scaling by inv_norm yields the final logits.
    logits = lax.dot_general(qn_ref[...], keys,
                             (((1,), (1,)), ((), ())),
                             preferred_element_type=jnp.float32)  # (B, tile_n)
    logits = logits * inv_norm

    if need_mask:   # ragged last tile / phantom tiles of the second shard
        col = (i * steps_per_core + k) * tile_n + lax.broadcasted_iota(
            jnp.int32, (1, tile_n), 1)
        logits = jnp.where(col < num_valid, logits, _NEG_INF)

    # online log-sum-exp update.
    m_prev = m_sc[...]
    m_new = jnp.maximum(m_prev, jnp.max(logits, axis=-1, keepdims=True))
    l_sc[...] = (jnp.exp(m_prev - m_new) * l_sc[...]
                 + jnp.sum(jnp.exp(logits - m_new), axis=-1, keepdims=True))
    m_sc[...] = m_new

    # emit this shard's partial (m, l); exact combine happens in the wrapper.
    @pl.when(k == pl.num_programs(1) - 1)
    def _finalize():
        m_out_ref[...] = m_sc[...][None, :, :]
        l_out_ref[...] = l_sc[...][None, :, :]


# ---------------------------------------------------------------------------
# wrapper
# ---------------------------------------------------------------------------
def _choose_tile_n(n, d, itemsize):
    """Largest 128-aligned key tile within the per-buffer VMEM byte budget."""
    if n * d * itemsize <= _TARGET_TILE_BYTES:
        return int(n)                         # single block == full dim (always legal)
    rows = (_TARGET_TILE_BYTES // (d * itemsize)) // 128 * 128
    rows = int(max(128, rows))                # no upper lane cap: budget is the cap
    return int(n) if rows >= n else rows


def _stream_lse_parts(qn, pos, keys, num_valid, tile_n):
    """Run the streaming kernel; returns per-shard (m, l) partials (C, B, 1)."""
    B, D = qn.shape
    steps = pl.cdiv(num_valid, tile_n)
    num_shards = _NUM_SHARDS if steps >= 2 else 1
    spc = pl.cdiv(steps, num_shards)                        # tiles per shard
    need_mask = (num_shards * spc * tile_n) != num_valid

    # clamp phantom tile indices of the last shard back in-bounds; the column
    # mask (which uses the UN-clamped index) discards their contribution.
    key_index_map = lambda i, k: (jnp.minimum(i * spc + k, steps - 1), 0)
    part_spec = pl.BlockSpec((1, B, 1), lambda i, k: (i, 0, 0))

    kernel = partial(_infonce_stream_kernel,
                     num_valid=int(num_valid), tile_n=int(tile_n),
                     steps_per_core=int(spc), need_mask=bool(need_mask))

    m_parts, l_parts = pl.pallas_call(
        kernel,
        out_shape=(jax.ShapeDtypeStruct((num_shards, B, 1), jnp.float32),
                   jax.ShapeDtypeStruct((num_shards, B, 1), jnp.float32)),
        grid_spec=pltpu.PrefetchScalarGridSpec(
            num_scalar_prefetch=0,
            grid=(num_shards, spc),
            in_specs=[
                pl.BlockSpec((B, D), lambda i, k: (0, 0)),       # qn (resident)
                pl.BlockSpec((B, 1), lambda i, k: (0, 0)),       # positive logit
                pl.BlockSpec((tile_n, D), key_index_map),        # keys, native (N, D)
            ],
            out_specs=[part_spec, part_spec],
            scratch_shapes=[
                pltpu.VMEM((B, 1), jnp.float32),   # running max   (per shard/core)
                pltpu.VMEM((B, 1), jnp.float32),   # running sumexp (per shard/core)
            ]),
        compiler_params=pltpu.CompilerParams(
            dimension_semantics=("parallel", "arbitrary"),
            vmem_limit_bytes=_VMEM_LIMIT_BYTES),
    )(qn, pos, keys)
    return m_parts, l_parts


def info_nce_pallas(query, positive_key, negative_keys=None, *,
                    temperature=0.1, reduction="mean",
                    negative_mode="unpaired", symmetric_loss=False,
                    tile_n=None):
    """Pallas TPU implementation of InfoNCE.forward (default configuration)."""
    if symmetric_loss:
        # TODO(synk): symmetric_loss needs a log_softmax over the batch axis too.
        raise NotImplementedError("symmetric_loss is not supported")
    if negative_keys is not None and negative_mode != "unpaired":
        # TODO(synk): 'paired' negative_mode (3-D negatives) is not wired up.
        raise NotImplementedError("only negative_mode='unpaired' is supported")
    if reduction not in ("mean", "sum", "none"):
        raise NotImplementedError(f"unsupported reduction: {reduction}")

    if query.ndim != 2 or positive_key.ndim != 2:
        raise ValueError("<query>/<positive_key> must have 2 dimensions.")
    if query.shape[0] != positive_key.shape[0]:
        raise ValueError("<query> and <positive_key> must have the same number of samples.")
    if query.shape[-1] != positive_key.shape[-1]:
        raise ValueError("embedding dims of <query> and <positive_key> must match.")

    B, D = query.shape
    inv_t = 1.0 / temperature

    # One-pass XLA prep over the small (B, D) operands: normalized q with 1/T
    # folded in (cast to the keys' matmul dtype) and the positive logit.
    q32 = _normalize_rows(query.astype(jnp.float32))
    p32 = _normalize_rows(positive_key.astype(jnp.float32))
    pos = jnp.sum(q32 * p32, axis=-1, keepdims=True) * inv_t          # (B, 1) f32

    if negative_keys is None:
        # self mode: logits = qn @ pn^T, labels = arange(B); the diagonal term
        # is exactly `pos` and flows through the key stream as well.
        keys = positive_key
        num_valid = B
        extra_pos_mass = 0.0          # positive logit already lives in the stream
    else:
        if negative_keys.ndim != 2:
            raise ValueError("<negative_keys> must have 2 dimensions (unpaired mode).")
        if negative_keys.shape[-1] != D:
            raise ValueError("embedding dim of <negative_keys> must match <query>.")
        keys = negative_keys
        num_valid = negative_keys.shape[0]
        extra_pos_mass = 1.0          # the positive logit is a separate column

    qn = (q32 * inv_t).astype(keys.dtype)                             # (B, D)

    if tile_n is None:
        tile_n = _choose_tile_n(num_valid, D, keys.dtype.itemsize)
    elif tile_n != num_valid and tile_n % 128 != 0:
        raise ValueError("tile_n must equal the number of keys or be a multiple of 128.")

    m_parts, l_parts = _stream_lse_parts(qn, pos, keys, num_valid, tile_n)

    # exact combine of the per-shard online-LSE partials (plus the positive
    # logit's own mass for unpaired mode), then the requested reduction.
    m_all = jnp.maximum(jnp.max(m_parts, axis=0), pos)                # (B, 1)
    l_all = jnp.sum(jnp.exp(m_parts - m_all) * l_parts, axis=0)
    l_all = l_all + extra_pos_mass * jnp.exp(pos - m_all)
    lse = m_all + jnp.log(l_all)
    per_row = (lse - pos)[:, 0]                                       # (B,)

    if reduction == "mean":
        return jnp.mean(per_row)
    if reduction == "sum":
        return jnp.sum(per_row)
    return per_row


# ---------------------------------------------------------------------------
# pure-JAX reference (mirrors the PyTorch code 1:1) for a correctness check
# ---------------------------------------------------------------------------
def _info_nce_ref(query, positive_key, negative_keys=None, temperature=0.1):
    q = _normalize_rows(query.astype(jnp.float32))
    p = _normalize_rows(positive_key.astype(jnp.float32))
    if negative_keys is not None:
        nk = _normalize_rows(negative_keys.astype(jnp.float32))
        pos = jnp.sum(q * p, axis=1, keepdims=True)
        neg = q @ nk.T
        logits = jnp.concatenate([pos, neg], axis=1) / temperature
        labels = jnp.zeros((logits.shape[0],), dtype=jnp.int32)
    else:
        logits = (q @ p.T) / temperature
        labels = jnp.arange(logits.shape[0])
    logp = jax.nn.log_softmax(logits, axis=1)
    return -jnp.mean(jnp.take_along_axis(logp, labels[:, None], axis=1))


if __name__ == "__main__":
    key = jax.random.PRNGKey(0)
    kq, kp, kn, kq2, kp2, kn2 = jax.random.split(key, 6)

    # path 1: explicit unpaired negatives, single-tile / single-shard path
    # (module docstring example scaled down: B=8, N=16, D=32)
    q1 = jax.random.normal(kq, (8, 32), dtype=jnp.float32)
    p1 = jax.random.normal(kp, (8, 32), dtype=jnp.float32)
    n1 = jax.random.normal(kn, (16, 32), dtype=jnp.float32)
    loss1 = jax.block_until_ready(info_nce_pallas(q1, p1, n1))
    ref1 = _info_nce_ref(q1, p1, n1)
    assert jnp.allclose(loss1, ref1, atol=1e-5, rtol=1e-5), (loss1, ref1)

    # path 2: streaming negatives in native (N, D) layout with 2 parallel
    # N-shards, a ragged last tile and one fully-masked phantom tile
    # (N=300, tile_n=128 -> 3 real tiles split 2/2 across the shards)
    q2 = jax.random.normal(kq2, (8, 128), dtype=jnp.float32)
    p2 = jax.random.normal(kp2, (8, 128), dtype=jnp.float32)
    n2 = jax.random.normal(kn2, (300, 128), dtype=jnp.float32)
    loss2 = jax.block_until_ready(info_nce_pallas(q2, p2, n2, tile_n=128))
    ref2 = _info_nce_ref(q2, p2, n2)
    assert jnp.allclose(loss2, ref2, atol=1e-5, rtol=1e-5), (loss2, ref2)

    # path 3: no negatives (in-batch negatives, labels = arange(B))
    loss3 = jax.block_until_ready(info_nce_pallas(q1, p1))
    ref3 = _info_nce_ref(q1, p1)
    assert jnp.allclose(loss3, ref3, atol=1e-5, rtol=1e-5), (loss3, ref3)

    print("KERNEL_OK")
</pallas_src>

<mosaic_0001>
module attributes {stable_mosaic.version = 11 : i64} {
  func.func @_infonce_stream_kernel(%arg0: i32, %arg1: i32, %arg2: memref<8x32xf32, #tpu.memory_space<vmem>>, %arg3: memref<8x1xf32, #tpu.memory_space<vmem>>, %arg4: memref<16x32xf32, #tpu.memory_space<vmem>>, %arg5: memref<1x8x1xf32, #tpu.memory_space<vmem>>, %arg6: memref<1x8x1xf32, #tpu.memory_space<vmem>>, %arg7: memref<8x1xf32, #tpu.memory_space<vmem>>, %arg8: memref<8x1xf32, #tpu.memory_space<vmem>>) attributes {dimension_semantics = [#tpu.dimension_semantics<parallel>, #tpu.dimension_semantics<arbitrary>], iteration_bounds = array<i64: 1, 1>, scalar_prefetch = 0 : i64, scratch_operands = 2 : i64, tpu.core_type = #tpu.core_type<tc>, window_params = [{pipeline_mode = #tpu.pipeline_mode<synchronous>, transform_indices = @transform_0, window_bounds = array<i64: 8, 32>}, {pipeline_mode = #tpu.pipeline_mode<synchronous>, transform_indices = @transform_1, window_bounds = array<i64: 8, 1>}, {transform_indices = @transform_2, window_bounds = array<i64: 16, 32>}, {transform_indices = @transform_3, window_bounds = array<i64: 1, 8, 1>}, {transform_indices = @transform_4, window_bounds = array<i64: 1, 8, 1>}]} {
    %c0_i32 = arith.constant 0 : i32
    %0 = arith.cmpi eq, %arg1, %c0_i32 : i32
    %1 = arith.extui %0 : i1 to i32
    %c0_i32_0 = arith.constant 0 : i32
    %2 = arith.cmpi ne, %1, %c0_i32_0 : i32
    scf.if %2 {
      %c0_19 = arith.constant 0 : index
      %c0_20 = arith.constant 0 : index
      %33 = vector.load %arg3[%c0_19, %c0_20] : memref<8x1xf32, #tpu.memory_space<vmem>>, vector<8x1xf32>
      %c0_21 = arith.constant 0 : index
      %c0_22 = arith.constant 0 : index
      %34 = vector.load %arg7[%c0_21, %c0_22] : memref<8x1xf32, #tpu.memory_space<vmem>>, vector<8x1xf32>
      tpu.vector_store %arg7[%c0_21, %c0_22], %33 {strides = array<i32>} : memref<8x1xf32, #tpu.memory_space<vmem>>, vector<8x1xf32>,
      %cst_23 = arith.constant 0.000000e+00 : f32
      %35 = vector.broadcast %cst_23 : f32 to vector<8x1xf32>
      %c0_24 = arith.constant 0 : index
      %c0_25 = arith.constant 0 : index
      %36 = vector.load %arg8[%c0_24, %c0_25] : memref<8x1xf32, #tpu.memory_space<vmem>>, vector<8x1xf32>
      tpu.vector_store %arg8[%c0_24, %c0_25], %35 {strides = array<i32>} : memref<8x1xf32, #tpu.memory_space<vmem>>, vector<8x1xf32>,
    } else {
    }
    %c0 = arith.constant 0 : index
    %c0_1 = arith.constant 0 : index
    %3 = vector.load %arg4[%c0, %c0_1] : memref<16x32xf32, #tpu.memory_space<vmem>>, vector<16x32xf32>
    %cst = arith.constant 1.000000e+00 : f32
    %4 = vector.broadcast %cst : f32 to vector<1x32xf32>
    %5 = arith.mulf %3, %3 : vector<16x32xf32>
    %cst_2 = arith.constant dense<0.000000e+00> : vector<1x16xf32>
    %6 = tpu.matmul %4, %5, %cst_2 {dimension_numbers = #tpu.dot_dimension_numbers<[1], [1], [0], [0], [0, 0, 1, 0], [], []>} : vector<1x32xf32>, vector<16x32xf32>, vector<1x16xf32> -> vector<1x16xf32>
    %cst_3 = arith.constant 1.000000e-24 : f32
    %7 = vector.broadcast %cst_3 : f32 to vector<1x16xf32>
    %8 = arith.maximumf %6, %7 : vector<1x16xf32>
    %9 = math.rsqrt %8 : vector<1x16xf32>
    %c0_4 = arith.constant 0 : index
    %c0_5 = arith.constant 0 : index
    %10 = vector.load %arg2[%c0_4, %c0_5] : memref<8x32xf32, #tpu.memory_space<vmem>>, vector<8x32xf32>
    %cst_6 = arith.constant dense<0.000000e+00> : vector<8x16xf32>
    %11 = tpu.matmul %10, %3, %cst_6 {dimension_numbers = #tpu.dot_dimension_numbers<[1], [1], [0], [0], [0, 0, 1, 0], [], []>} : vector<8x32xf32>, vector<16x32xf32>, vector<8x16xf32> -> vector<8x16xf32>
    %12 = vector.broadcast %9 : vector<1x16xf32> to vector<8x16xf32>
    %13 = arith.mulf %11, %12 : vector<8x16xf32>
    %c0_7 = arith.constant 0 : index
    %c0_8 = arith.constant 0 : index
    %14 = vector.load %arg7[%c0_7, %c0_8] : memref<8x1xf32, #tpu.memory_space<vmem>>, vector<8x1xf32>
    %cst_9 = arith.constant dense<0xFF800000> : vector<8xf32>
    %15 = vector.multi_reduction <maximumf>, %13, %cst_9 [1] : vector<8x16xf32> to vector<8xf32>
    %16 = vector.shape_cast %15 : vector<8xf32> to vector<8x1xf32>
    %17 = arith.maximumf %14, %16 : vector<8x1xf32>
    %18 = arith.subf %14, %17 : vector<8x1xf32>
    %19 = math.exp %18 : vector<8x1xf32>
    %c0_10 = arith.constant 0 : index
    %c0_11 = arith.constant 0 : index
    %20 = vector.load %arg8[%c0_10, %c0_11] : memref<8x1xf32, #tpu.memory_space<vmem>>, vector<8x1xf32>
    %21 = arith.mulf %19, %20 : vector<8x1xf32>
    %22 = vector.broadcast %17 : vector<8x1xf32> to vector<8x16xf32>
    %23 = arith.subf %13, %22 : vector<8x16xf32>
    %24 = math.exp %23 : vector<8x16xf32>
    %cst_12 = arith.constant dense<0.000000e+00> : vector<8xf32>
    %25 = vector.multi_reduction <add>, %24, %cst_12 [1] : vector<8x16xf32> to vector<8xf32>
    %26 = vector.shape_cast %25 : vector<8xf32> to vector<8x1xf32>
    %27 = arith.addf %21, %26 : vector<8x1xf32>
    %c0_13 = arith.constant 0 : index
    %c0_14 = arith.constant 0 : index
    %28 = vector.load %arg8[%c0_13, %c0_14] : memref<8x1xf32, #tpu.memory_space<vmem>>, vector<8x1xf32>
    tpu.vector_store %arg8[%c0_13, %c0_14], %27 {strides = array<i32>} : memref<8x1xf32, #tpu.memory_space<vmem>>, vector<8x1xf32>,
    %c0_15 = arith.constant 0 : index
    %c0_16 = arith.constant 0 : index
    %29 = vector.load %arg7[%c0_15, %c0_16] : memref<8x1xf32, #tpu.memory_space<vmem>>, vector<8x1xf32>
    tpu.vector_store %arg7[%c0_15, %c0_16], %17 {strides = array<i32>} : memref<8x1xf32, #tpu.memory_space<vmem>>, vector<8x1xf32>,
    %c0_i32_17 = arith.constant 0 : i32
    %30 = arith.cmpi eq, %arg1, %c0_i32_17 : i32
    %31 = arith.extui %30 : i1 to i32
    %c0_i32_18 = arith.constant 0 : i32
    %32 = arith.cmpi ne, %31, %c0_i32_18 : i32
    scf.if %32 {
      %c0_19 = arith.constant 0 : index
      %c0_20 = arith.constant 0 : index
      %33 = vector.load %arg7[%c0_19, %c0_20] : memref<8x1xf32, #tpu.memory_space<vmem>>, vector<8x1xf32>
      %34 = vector.shape_cast %33 : vector<8x1xf32> to vector<1x8x1xf32>
      %c0_21 = arith.constant 0 : index
      %c0_22 = arith.constant 0 : index
      %c0_23 = arith.constant 0 : index
      %35 = vector.load %arg5[%c0_21, %c0_22, %c0_23] : memref<1x8x1xf32, #tpu.memory_space<vmem>>, vector<1x8x1xf32>
      tpu.vector_store %arg5[%c0_21, %c0_22, %c0_23], %34 {strides = array<i32>} : memref<1x8x1xf32, #tpu.memory_space<vmem>>, vector<1x8x1xf32>,
      %c0_24 = arith.constant 0 : index
      %c0_25 = arith.constant 0 : index
      %36 = vector.load %arg8[%c0_24, %c0_25] : memref<8x1xf32, #tpu.memory_space<vmem>>, vector<8x1xf32>
      %37 = vector.shape_cast %36 : vector<8x1xf32> to vector<1x8x1xf32>
      %c0_26 = arith.constant 0 : index
      %c0_27 = arith.constant 0 : index
      %c0_28 = arith.constant 0 : index
      %38 = vector.load %arg6[%c0_26, %c0_27, %c0_28] : memref<1x8x1xf32, #tpu.memory_space<vmem>>, vector<1x8x1xf32>
      tpu.vector_store %arg6[%c0_26, %c0_27, %c0_28], %37 {strides = array<i32>} : memref<1x8x1xf32, #tpu.memory_space<vmem>>, vector<1x8x1xf32>,
    } else {
    }
    return
  }
  func.func @transform_0(%arg0: i32, %arg1: i32) -> (i32, i32) {
    %c0_i32 = arith.constant 0 : i32
    %c0_i32_0 = arith.constant 0 : i32
    %c0_i32_1 = arith.constant 0 : i32
    return %c0_i32, %c0_i32_0 : i32, i32
  }
  func.func @transform_1(%arg0: i32, %arg1: i32) -> (i32, i32) {
    %c0_i32 = arith.constant 0 : i32
    %c0_i32_0 = arith.constant 0 : i32
    %c0_i32_1 = arith.constant 0 : i32
    return %c0_i32, %c0_i32_0 : i32, i32
  }
  func.func @transform_2(%arg0: i32, %arg1: i32) -> (i32, i32) {
    %c1_i32 = arith.constant 1 : i32
    %0 = arith.muli %arg0, %c1_i32 : i32
    %1 = arith.addi %0, %arg1 : i32
    %c0_i32 = arith.constant 0 : i32
    %2 = arith.minsi %1, %c0_i32 : i32
    %c0_i32_0 = arith.constant 0 : i32
    %c0_i32_1 = arith.constant 0 : i32
    return %2, %c0_i32_0 : i32, i32
  }
  func.func @transform_3(%arg0: i32, %arg1: i32) -> (i32, i32, i32) {
    %c0_i32 = arith.constant 0 : i32
    %c0_i32_0 = arith.constant 0 : i32
    %c0_i32_1 = arith.constant 0 : i32
    return %arg0, %c0_i32, %c0_i32_0 : i32, i32, i32
  }
  func.func @transform_4(%arg0: i32, %arg1: i32) -> (i32, i32, i32) {
    %c0_i32 = arith.constant 0 : i32
    %c0_i32_0 = arith.constant 0 : i32
    %c0_i32_1 = arith.constant 0 : i32
    return %arg0, %c0_i32, %c0_i32_0 : i32, i32, i32
  }
}

</mosaic_0001>

<llo_original>
// kernel: tpu_custom_call.1
$region0: #{tpu_custom_call.1}
  #allocation0 [shape = 'u32[]', space=smem, size = 0x4, offset = 0x4, fixed_abs, tag = 'smem constant byte address 0x4 - core index']
  #allocation1 [shape = 'u32[144,128]{1,0:T(1,128)}', space=vmem, size = 0x12000, scoped, tag = 'internal scratch']
  #allocation2 [shape = 'f32[8,1]{1,0:T(8,128)}', space=vmem, size = 0x1000, scoped, tag = 'scratch operand']
  #allocation3 [shape = 'f32[8,1]{1,0:T(8,128)}', space=vmem, size = 0x1000, scoped, tag = 'scratch operand']
  %s0 = inlined_call_operand.hbm [shape: f32[8,32], index: 0, kind: input, shape index: {}]
  %s1 = inlined_call_operand.vmem [shape: f32[8,1], index: 1, kind: input, shape index: {}]
  %s2 = inlined_call_operand.vmem [shape: f32[16,32], index: 2, kind: input, shape index: {}]
  %s3 = inlined_call_operand.vmem [shape: f32[1,8,1], index: 3, kind: output, shape index: {0}]
  %s4 = inlined_call_operand.vmem [shape: f32[1,8,1], index: 4, kind: output, shape index: {1}]
  %5 = xla_tuple %s3, %s4
  %s6 = sld [smem:[#allocation0]]
  $region42: #{tpu_custom_call.1} parent=0
    _
  %s8 = ssub.s32 1, %s6
  %s9 = scalar_select 0, %s8, %s6
  $region1: #{tpu_custom_call.1} parent=0
    #allocation4 [shape = 'u8[4096]{0}', space=vmem, size = 0x1000, scoped, tag = 'input window, operand 0, single buffered']
    #allocation5 [shape = 's32[1]{0}', space=sflag, size = 0x4, scoped, tag = 'scoped memory for tpu_custom_call.1']
    %10 = vsyncpa [#allocation5], 0
    // Predicated region
    $region2: #{tpu_custom_call.1} parent=1 // pred_check
      _
    $region3: #{tpu_custom_call.1} parent=1 // pred_check_branch
      %12 = sbr.rel (0) target = $region5
    $region4: #{tpu_custom_call.1} parent=1 // pred_region
      %s14 = ssub.s32 128, 128
      %15 = vsyncadd [#allocation5], %s14
      %s17 = sshll.u32 [#allocation4], 4
      %s18 = int_to_ptr.vmem [resolvable:$true] %s17
      %20 = dma.hbm_to_vmem [thread:$0]  %s0, 128, %s18, [#allocation5]
    $region5: #{tpu_custom_call.1} parent=1 // pred_fallthru
      _
    // Predicated region
    $region6: #{tpu_custom_call.1} parent=1 // pred_check
      _
    $region7: #{tpu_custom_call.1} parent=1 // pred_check_branch
      %22 = sbr.rel (0) target = $region9
    $region8: #{tpu_custom_call.1} parent=1 // pred_region
      _
    $region9: #{tpu_custom_call.1} parent=1 // pred_fallthru
      _
    // Predicated region
    $region10: #{tpu_custom_call.1} parent=1 // pred_check
      _
    $region11: #{tpu_custom_call.1} parent=1 // pred_check_branch
      %24 = sbr.rel (0) target = $region13
    $region12: #{tpu_custom_call.1} parent=1 // pred_region
      %s25 = sadd.s32 0, 0
      %p26 = scmp.lt.s32.totalorder %s25, 0
      %s27 = scalar_select %p26, %s25, 0
      %s28 = smul.u32 2, %s27
      %p29 = scmp.lt.s32.totalorder %s28, 1
      %s30 = scalar_select %p29, %s28, 1
      %s31 = smul.addr %s30, 8
      %s32 = scalar_lea.vmem %s2, %s31
      %s33 = sadd.s32 0, 0
      %p34 = scmp.lt.s32.totalorder %s33, 0
      %s35 = scalar_select %p34, %s33, 0
      %s36 = smul.u32 2, %s35
    $region13: #{tpu_custom_call.1} parent=1 // pred_fallthru
      _
    // Predicated region
    $region14: #{tpu_custom_call.1} parent=1 // pred_check
      _
    $region15: #{tpu_custom_call.1} parent=1 // pred_check_branch
      %38 = sbr.rel (0) target = $region17
    $region16: #{tpu_custom_call.1} parent=1 // pred_region
      %39 = dma.done [#allocation5], 128
    $region17: #{tpu_custom_call.1} parent=1 // pred_fallthru
      _
    %s40 = sadd.s32 0, 0
    %p41 = scmp.lt.s32.totalorder %s40, 0
    %s42 = scalar_select %p41, %s40, 0
    %s43 = smul.u32 2, %s42
    %p44 = scmp.lt.s32.totalorder %s43, 1
    %s45 = scalar_select %p44, %s43, 1
    %s46 = smul.addr %s45, 8
    %s47 = scalar_lea.vmem %s2, %s46
    %s48 = sadd.s32 0, 0
    %p49 = scmp.lt.s32.totalorder %s48, 0
    %s50 = scalar_select %p49, %s48, 0
    %s51 = smul.u32 2, %s50
    %p52 = scmp.lt.s32.totalorder %s51, 1
    %s53 = scalar_select %p52, %s51, 1
    %s54 = smul.addr %s53, 8
    %s55 = scalar_lea.vmem %s2, %s54
    %s56 = sadd.s32 0, 0
    %p57 = scmp.lt.s32.totalorder %s56, 0
    %s58 = scalar_select %p57, %s56, 0
    %s59 = smul.u32 2, %s58
    %p60 = scmp.eq.s32.totalorder 0, 0
    // Predicated region
    $region18: #{tpu_custom_call.1} parent=1 // pred_check
      %p61 = pneg %p60
    $region19: #{tpu_custom_call.1} parent=1 // pred_check_branch
      %63 = sbr.rel (%p61) target = $region21
    $region20: #{tpu_custom_call.1} parent=1 // pred_region
      %v64 = vld [vmem:[%s1] sm:$0xff]
      %vm65 = vcmask 7168
      %66 = vst.msk [vmem:[#allocation2] sm:$0xff] %vm65, %v64
      %67 = vst.msk [vmem:[#allocation3] sm:$0xff] %vm65, 0.0
    $region21: #{tpu_custom_call.1} parent=1 // pred_fallthru
      _
    %v68 = vld [vmem:[%s55] sm:$0xff]
    %v69 = vld [vmem:[%s55 + $0x8] sm:$0xff]
    %v70 = vmul.f32 %v68, %v68
    %v71 = vmul.f32 %v69, %v69
    %vm72 = vcmask 261120
    %v74 = vsel %vm72, 1.0, 0
    %v77 = vsel %vm72, %v70, 0
    %v80 = vsel %vm72, %v71, 0
    %82 = vmatprep.subr.mxu0 0.0
    %83 = vmatpush1.xpose.msra.mxu0 %v77
    %84 = vmatprep.subr.mxu0 0.0
    %85 = vmatpush1.xpose.msra.mxu0 %v80
    %86 = vmatprep.subr.mxu0 0.0
    %87 = vmatpush1.xpose.msra.mxu0 0.0
    %88 = vmatprep.subr.mxu0 0.0
    %89 = vmatpush1.xpose.msra.mxu0 0.0
    %90 = vmatprep.subr.mxu0 0.0
    %91 = vmatpush1.xpose.msra.mxu0 0.0
    %92 = vmatprep.subr.mxu0 0.0
    %93 = vmatpush1.xpose.msra.mxu0 0.0
    %94 = vmatprep.subr.mxu0 0.0
    %95 = vmatpush1.xpose.msra.mxu0 0.0
    %96 = vmatprep.subr.mxu0 0.0
    %97 = vmatpush1.xpose.msra.mxu0 0.0
    %98 = vmatprep.subr.mxu0 0.0
    %99 = vmatpush1.xpose.msra.mxu0 0.0
    %100 = vmatprep.subr.mxu0 0.0
    %101 = vmatpush1.xpose.msra.mxu0 0.0
    %102 = vmatprep.subr.mxu0 0.0
    %103 = vmatpush1.xpose.msra.mxu0 0.0
    %104 = vmatprep.subr.mxu0 0.0
    %105 = vmatpush1.xpose.msra.mxu0 0.0
    %106 = vmatprep.subr.mxu0 0.0
    %107 = vmatpush1.xpose.msra.mxu0 0.0
    %108 = vmatprep.subr.mxu0 0.0
    %109 = vmatpush1.xpose.msra.mxu0 0.0
    %110 = vmatprep.subr.mxu0 0.0
    %111 = vmatpush1.xpose.msra.mxu0 0.0
    %112 = vmatprep.subr.mxu0 0.0
    %113 = vmatpush1.xpose.msra.mxu0 0.0
    %114 = vmatprep.subr.mxu0 0.0
    %115 = vmatpush1.xpose.msra.mxu0 0.0
    %116 = vmatprep.subr.mxu0 0.0
    %117 = vmatpush1.xpose.msra.mxu0 0.0
    %118 = vmatprep.subr.mxu0 0.0
    %119 = vmatpush1.xpose.msra.mxu0 0.0
    %120 = vmatprep.subr.mxu0 0.0
    %121 = vmatpush1.xpose.msra.mxu0 0.0
    %122 = vmatprep.subr.mxu0 0.0
    %123 = vmatpush1.xpose.msra.mxu0 0.0
    %124 = vmatprep.subr.mxu0 0.0
    %125 = vmatpush1.xpose.msra.mxu0 0.0
    %126 = vmatprep.subr.mxu0 0.0
    %127 = vmatpush1.xpose.msra.mxu0 0.0
    %128 = vmatprep.subr.mxu0 0.0
    %129 = vmatpush1.xpose.msra.mxu0 0.0
    %130 = vmatprep.subr.mxu0 0.0
    %131 = vmatpush1.xpose.msra.mxu0 0.0
    %132 = vmatprep.subr.mxu0 0.0
    %133 = vmatpush1.xpose.msra.mxu0 0.0
    %134 = vmatprep.subr.mxu0 0.0
    %135 = vmatpush1.xpose.msra.mxu0 0.0
    %136 = vmatprep.subr.mxu0 0.0
    %137 = vmatpush1.xpose.msra.mxu0 0.0
    %138 = vmatprep.subr.mxu0 0.0
    %139 = vmatpush1.xpose.msra.mxu0 0.0
    %140 = vmatprep.subr.mxu0 0.0
    %141 = vmatpush1.xpose.msra.mxu0 0.0
    %142 = vmatprep.subr.mxu0 0.0
    %143 = vmatpush1.xpose.msra.mxu0 0.0
    %144 = vmatprep.subr.mxu0 0.0
    %145 = vmatpush1.xpose.msra.mxu0 0.0
    %146 = vmatprep.mubr.f32.mxu0 0.0
    %147 = vmatmul.mubr.f32.gmra.mrb[0].mxu0 %v74
    %v148 = vpop.f32.mrb[0].mxu0
    %v149 = vadd.f32 0.0, %v148
    %v150 = vpop.f32.mrb[0].mxu0
    %151 = vdwg.mxu0
    %v152 = vmax.f32 %v149, 1e-24
    %v153 = vrsqrt.pop %v152
    %v154 = vld [vmem:[#allocation4] sm:$0xff]
    %v156 = vsel %vm72, %v154, 0
    %v159 = vsel %vm72, %v68, 0
    %v162 = vsel %vm72, %v69, 0
    %164 = vmatprep.subr.mxu0 0.0
    %165 = vmatpush1.xpose.msra.mxu0 %v159
    %166 = vmatprep.subr.mxu0 0.0
    %167 = vmatpush1.xpose.msra.mxu0 %v162
    %168 = vmatprep.subr.mxu0 0.0
    %169 = vmatpush1.xpose.msra.mxu0 0.0
    %170 = vmatprep.subr.mxu0 0.0
    %171 = vmatpush1.xpose.msra.mxu0 0.0
    %172 = vmatprep.subr.mxu0 0.0
    %173 = vmatpush1.xpose.msra.mxu0 0.0
    %174 = vmatprep.subr.mxu0 0.0
    %175 = vmatpush1.xpose.msra.mxu0 0.0
    %176 = vmatprep.subr.mxu0 0.0
    %177 = vmatpush1.xpose.msra.mxu0 0.0
    %178 = vmatprep.subr.mxu0 0.0
    %179 = vmatpush1.xpose.msra.mxu0 0.0
    %180 = vmatprep.subr.mxu0 0.0
    %181 = vmatpush1.xpose.msra.mxu0 0.0
    %182 = vmatprep.subr.mxu0 0.0
    %183 = vmatpush1.xpose.msra.mxu0 0.0
    %184 = vmatprep.subr.mxu0 0.0
    %185 = vmatpush1.xpose.msra.mxu0 0.0
    %186 = vmatprep.subr.mxu0 0.0
    %187 = vmatpush1.xpose.msra.mxu0 0.0
    %188 = vmatprep.subr.mxu0 0.0
    %189 = vmatpush1.xpose.msra.mxu0 0.0
    %190 = vmatprep.subr.mxu0 0.0
    %191 = vmatpush1.xpose.msra.mxu0 0.0
    %192 = vmatprep.subr.mxu0 0.0
    %193 = vmatpush1.xpose.msra.mxu0 0.0
    %194 = vmatprep.subr.mxu0 0.0
    %195 = vmatpush1.xpose.msra.mxu0 0.0
    %196 = vmatprep.subr.mxu0 0.0
    %197 = vmatpush1.xpose.msra.mxu0 0.0
    %198 = vmatprep.subr.mxu0 0.0
    %199 = vmatpush1.xpose.msra.mxu0 0.0
    %200 = vmatprep.subr.mxu0 0.0
    %201 = vmatpush1.xpose.msra.mxu0 0.0
    %202 = vmatprep.subr.mxu0 0.0
    %203 = vmatpush1.xpose.msra.mxu0 0.0
    %204 = vmatprep.subr.mxu0 0.0
    %205 = vmatpush1.xpose.msra.mxu0 0.0
    %206 = vmatprep.subr.mxu0 0.0
    %207 = vmatpush1.xpose.msra.mxu0 0.0
    %208 = vmatprep.subr.mxu0 0.0
    %209 = vmatpush1.xpose.msra.mxu0 0.0
    %210 = vmatprep.subr.mxu0 0.0
    %211 = vmatpush1.xpose.msra.mxu0 0.0
    %212 = vmatprep.subr.mxu0 0.0
    %213 = vmatpush1.xpose.msra.mxu0 0.0
    %214 = vmatprep.subr.mxu0 0.0
    %215 = vmatpush1.xpose.msra.mxu0 0.0
    %216 = vmatprep.subr.mxu0 0.0
    %217 = vmatpush1.xpose.msra.mxu0 0.0
    %218 = vmatprep.subr.mxu0 0.0
    %219 = vmatpush1.xpose.msra.mxu0 0.0
    %220 = vmatprep.subr.mxu0 0.0
    %221 = vmatpush1.xpose.msra.mxu0 0.0
    %222 = vmatprep.subr.mxu0 0.0
    %223 = vmatpush1.xpose.msra.mxu0 0.0
    %224 = vmatprep.subr.mxu0 0.0
    %225 = vmatpush1.xpose.msra.mxu0 0.0
    %226 = vmatprep.subr.mxu0 0.0
    %227 = vmatpush1.xpose.msra.mxu0 0.0
    %228 = vmatprep.mubr.f32.mxu0 0.0
    %229 = vmatmul.mubr.f32.gmra.mrb[0].mxu0 %v156
    %v230 = vpop.f32.mrb[0].mxu0
    %v231 = vadd.f32 0.0, %v230
    %v232 = vpop.f32.mrb[0].mxu0
    %233 = vdwg.mxu0
    %v234 = vlaneseq
    %v235 = vshrl.u32 %v234, 7
    %v236 = vsub.s32 0, %v235
    %v237 = vrot.slane %v153, %v236
    %v238 = vmul.f32 %v231, %v237
    %v239 = vld [vmem:[#allocation2] sm:$0xff]
    %vm240 = vcmask 130048
    %v241 = vsel %vm240, %v238, -inf
    %242 = vmax.xlane.f32.xlu0 %v241
    %v243 = vpop.xlane.xlu0 %242
    %v244 = vmax.f32 %v239, %v243
    %v245 = vsub.f32 %v239, %v244
    %v246 = vmul.f32 %v245, 1.442695
    %v247 = vpow.pop %v246
    %v248 = vld [vmem:[#allocation3] sm:$0xff]
    %v249 = vmul.f32 %v247, %v248
    %251 = vset.pattern.permute.xlu0 0
    %252 = vperm.xlu0 %251, %v244
    %v253 = vpop.permute.xlu0 %252
    %v255 = vsub.f32 %v238, %v253
    %v256 = vmul.f32 %v255, 1.442695
    %v257 = vpow.pop %v256
    %v258 = vsel %vm240, %v257, 0.0
    %259 = vadd.xlane.f32.xlu0 %v258
    %v260 = vpop.xlane.xlu0 %259
    %v261 = vadd.f32 %v249, %v260
    %vm262 = vcmask 7168
    %263 = vst.msk [vmem:[#allocation3] sm:$0xff] %vm262, %v261
    %264 = vst.msk [vmem:[#allocation2] sm:$0xff] %vm262, %v244
    // Predicated region
    $region22: #{tpu_custom_call.1} parent=1 // pred_check
      %p265 = pneg %p60
    $region23: #{tpu_custom_call.1} parent=1 // pred_check_branch
      %267 = sbr.rel (%p265) target = $region25
    $region24: #{tpu_custom_call.1} parent=1 // pred_region
      %v268 = vld [vmem:[#allocation2] sm:$0xff]
      %269 = vst.msk [vmem:[%s3] sm:$0xff] %vm262, %v268
      %v270 = vld [vmem:[#allocation3] sm:$0xff]
      %271 = vst.msk [vmem:[%s4] sm:$0xff] %vm262, %v270
    $region25: #{tpu_custom_call.1} parent=1 // pred_fallthru
      _
    // Predicated region
    $region26: #{tpu_custom_call.1} parent=1 // pred_check
      _
    $region27: #{tpu_custom_call.1} parent=1 // pred_check_branch
      %273 = sbr.rel (0) target = $region29
    $region28: #{tpu_custom_call.1} parent=1 // pred_region
      _
    $region29: #{tpu_custom_call.1} parent=1 // pred_fallthru
      _
    // Predicated region
    $region30: #{tpu_custom_call.1} parent=1 // pred_check
      _
    $region31: #{tpu_custom_call.1} parent=1 // pred_check_branch
      %275 = sbr.rel (0) target = $region33
    $region32: #{tpu_custom_call.1} parent=1 // pred_region
      _
    $region33: #{tpu_custom_call.1} parent=1 // pred_fallthru
      _
    // Predicated region
    $region34: #{tpu_custom_call.1} parent=1 // pred_check
      _
    $region35: #{tpu_custom_call.1} parent=1 // pred_check_branch
      %277 = sbr.rel (0) target = $region37
    $region36: #{tpu_custom_call.1} parent=1 // pred_region
      _
    $region37: #{tpu_custom_call.1} parent=1 // pred_fallthru
      _
    // Predicated region
    $region38: #{tpu_custom_call.1} parent=1 // pred_check
      _
    $region39: #{tpu_custom_call.1} parent=1 // pred_check_branch
      %279 = sbr.rel (0) target = $region41
    $region40: #{tpu_custom_call.1} parent=1 // pred_region
      _
    $region41: #{tpu_custom_call.1} parent=1 // pred_fallthru
      _
    %280 = vsyncpa [#allocation5], 1

</llo_original>
